<compile_context>
chip_gen: v5e
topology: v5e:2x2
jax: 0.10.0
libtpu: 0.0.40
codegen_flags: <defaults>
</compile_context>

<pallas_src>
import functools

import jax
import jax.numpy as jnp
import numpy as np
from jax.experimental import pallas as pl
from jax.experimental.pallas import tpu as pltpu

LEAKY_SLOPE = 0.2
BN_EPS = 1e-5


# ----------------------------------------------------------------------------
# In-kernel helpers
# ----------------------------------------------------------------------------
def _leaky_relu(x):
    return jnp.where(x >= 0, x, LEAKY_SLOPE * x)


def _bn_lrelu(y, gamma, beta):
    """Training-mode BatchNorm (biased stats over the full M rows resident in
    the tile) followed by LeakyReLU(0.2)."""
    mean = jnp.mean(y, axis=0, keepdims=True)
    var = jnp.mean(jnp.square(y - mean), axis=0, keepdims=True)
    z = (y - mean) * jax.lax.rsqrt(var + BN_EPS) * gamma + beta
    return _leaky_relu(z)


def _head_partial(z_f32, w4_vals):
    """Per-row partial of the 1-output-channel head for this channel slice:
    bf16(z) * bf16(w4) accumulated in f32, reduced over lanes -> (1, M, 1)."""
    zh = z_f32.astype(jnp.bfloat16).astype(jnp.float32)
    w4 = w4_vals.astype(jnp.float32)
    return jnp.sum(zh * w4, axis=-1, keepdims=True)[None]


# ----------------------------------------------------------------------------
# Pallas kernels
# ----------------------------------------------------------------------------
def _mm_bias_lrelu_1k_kernel(a_ref, w_ref, b_ref, o_ref):
    """Single-K-step conv-as-matmul + bias + LeakyReLU (no accumulator)."""
    y = jnp.dot(a_ref[...], w_ref[...], preferred_element_type=jnp.float32)
    o_ref[...] = _leaky_relu(y + b_ref[...]).astype(o_ref.dtype)


def _mm_bias_lrelu_kernel(a_ref, w_ref, b_ref, o_ref, acc_ref):
    """Multi-K fallback: tiled matmul with f32 accumulator, bias + LeakyReLU."""
    k = pl.program_id(2)

    @pl.when(k == 0)
    def _():
        acc_ref[...] = jnp.zeros_like(acc_ref)

    acc_ref[...] += jnp.dot(a_ref[...], w_ref[...],
                            preferred_element_type=jnp.float32)

    @pl.when(k == pl.num_programs(2) - 1)
    def _():
        o_ref[...] = _leaky_relu(acc_ref[...] + b_ref[...]).astype(o_ref.dtype)


def _mm_bn_lrelu_1k_kernel(a_ref, w_ref, b_ref, g_ref, be_ref, o_ref):
    """Single-K-step conv-as-matmul + conv-bias + BatchNorm(train) + LReLU.
    Full M (= N*HO*WO) is resident, so per-channel stats are exact."""
    y = jnp.dot(a_ref[...], w_ref[...], preferred_element_type=jnp.float32)
    z = _bn_lrelu(y + b_ref[...], g_ref[...], be_ref[...])
    o_ref[...] = z.astype(o_ref.dtype)


def _mm_bn_lrelu_kernel(a_ref, w_ref, b_ref, g_ref, be_ref, o_ref, acc_ref):
    """Multi-K fallback of the fused BN layer."""
    k = pl.program_id(1)

    @pl.when(k == 0)
    def _():
        acc_ref[...] = jnp.zeros_like(acc_ref)

    acc_ref[...] += jnp.dot(a_ref[...], w_ref[...],
                            preferred_element_type=jnp.float32)

    @pl.when(k == pl.num_programs(1) - 1)
    def _():
        z = _bn_lrelu(acc_ref[...] + b_ref[...], g_ref[...], be_ref[...])
        o_ref[...] = z.astype(o_ref.dtype)


def _mm_bn_lrelu_head_1k_kernel(a_ref, w_ref, b_ref, g_ref, be_ref, w4_ref,
                                o_ref, part_ref):
    """Layer-3 kernel: conv-matmul + bias + BN + LReLU, plus the fused head:
    per-row partial dot of the activations against the matching slice of the
    final 1-channel conv weight (reduced to a scalar per batch in the wrapper)."""
    y = jnp.dot(a_ref[...], w_ref[...], preferred_element_type=jnp.float32)
    z = _bn_lrelu(y + b_ref[...], g_ref[...], be_ref[...])
    o_ref[...] = z.astype(o_ref.dtype)
    part_ref[...] = _head_partial(z, w4_ref[...])


def _mm_bn_lrelu_head_kernel(a_ref, w_ref, b_ref, g_ref, be_ref, w4_ref,
                             o_ref, part_ref, acc_ref):
    """Multi-K fallback of the layer-3 + fused-head kernel."""
    k = pl.program_id(1)

    @pl.when(k == 0)
    def _():
        acc_ref[...] = jnp.zeros_like(acc_ref)

    acc_ref[...] += jnp.dot(a_ref[...], w_ref[...],
                            preferred_element_type=jnp.float32)

    @pl.when(k == pl.num_programs(1) - 1)
    def _():
        z = _bn_lrelu(acc_ref[...] + b_ref[...], g_ref[...], be_ref[...])
        o_ref[...] = z.astype(o_ref.dtype)
        part_ref[...] = _head_partial(z, w4_ref[...])


# ----------------------------------------------------------------------------
# Wrappers
# ----------------------------------------------------------------------------
def _largest_divisor(dim, prefs):
    for p in prefs:
        if p <= dim and dim % p == 0:
            return p
    return dim


def _choose_tk(K, tn, elem_bytes=2, max_block_bytes=4 << 20):
    """Largest tk dividing K whose (tk, tn) bf16 weight block stays <= ~4 MB so
    double-buffered weight DMAs are safe on every generation incl. v7x's
    64 MiB VMEM / 32 MB scoped default.  For this network every layer ends up
    with a single K step (fast path, no accumulator)."""
    for tk in (K, 8192, 4096, 2048, 1024, 512, 256, 128):
        if tk <= K and K % tk == 0 and tk * tn * elem_bytes <= max_block_bytes:
            return tk
    return K


def matmul_bias_lrelu(a, w, b, *, tm, tn, tk, out_dtype=jnp.bfloat16):
    """a: (M, K) bf16, w: (K, N) bf16, b: (1, N) f32 -> (M, N) out_dtype."""
    M, K = a.shape
    K2, N = w.shape
    assert K == K2 and b.shape == (1, N)
    nk = K // tk
    if nk == 1:
        return pl.pallas_call(
            _mm_bias_lrelu_1k_kernel,
            out_shape=jax.ShapeDtypeStruct((M, N), out_dtype),
            grid_spec=pltpu.PrefetchScalarGridSpec(
                num_scalar_prefetch=0,
                grid=(M // tm, N // tn),
                in_specs=[
                    pl.BlockSpec((tm, K), lambda i, j: (i, 0)),
                    pl.BlockSpec((K, tn), lambda i, j: (0, j)),
                    pl.BlockSpec((1, tn), lambda i, j: (0, j)),
                ],
                out_specs=pl.BlockSpec((tm, tn), lambda i, j: (i, j)),
            ),
            compiler_params=pltpu.CompilerParams(
                dimension_semantics=("parallel", "parallel")),
        )(a, w, b)
    return pl.pallas_call(
        _mm_bias_lrelu_kernel,
        out_shape=jax.ShapeDtypeStruct((M, N), out_dtype),
        grid_spec=pltpu.PrefetchScalarGridSpec(
            num_scalar_prefetch=0,
            grid=(M // tm, N // tn, nk),
            in_specs=[
                pl.BlockSpec((tm, tk), lambda i, j, k: (i, k)),
                pl.BlockSpec((tk, tn), lambda i, j, k: (k, j)),
                pl.BlockSpec((1, tn), lambda i, j, k: (0, j)),
            ],
            out_specs=pl.BlockSpec((tm, tn), lambda i, j, k: (i, j)),
            scratch_shapes=[pltpu.VMEM((tm, tn), jnp.float32)],
        ),
        compiler_params=pltpu.CompilerParams(
            dimension_semantics=("parallel", "parallel", "arbitrary")),
    )(a, w, b)


def matmul_bn_lrelu(a, w, b, gamma, beta, *, tn, tk, out_dtype=jnp.bfloat16):
    """Fused conv-matmul + conv-bias + BatchNorm(train stats) + LeakyReLU.
    a: (M, K) bf16, w: (K, N) bf16, b/gamma/beta: (1, N) f32 -> (M, N)."""
    M, K = a.shape
    K2, N = w.shape
    assert K == K2
    nk = K // tk
    if nk == 1:
        return pl.pallas_call(
            _mm_bn_lrelu_1k_kernel,
            out_shape=jax.ShapeDtypeStruct((M, N), out_dtype),
            grid_spec=pltpu.PrefetchScalarGridSpec(
                num_scalar_prefetch=0,
                grid=(N // tn,),
                in_specs=[
                    pl.BlockSpec((M, K), lambda j: (0, 0)),
                    pl.BlockSpec((K, tn), lambda j: (0, j)),
                    pl.BlockSpec((1, tn), lambda j: (0, j)),
                    pl.BlockSpec((1, tn), lambda j: (0, j)),
                    pl.BlockSpec((1, tn), lambda j: (0, j)),
                ],
                out_specs=pl.BlockSpec((M, tn), lambda j: (0, j)),
            ),
            compiler_params=pltpu.CompilerParams(
                dimension_semantics=("parallel",)),
        )(a, w, b, gamma, beta)
    return pl.pallas_call(
        _mm_bn_lrelu_kernel,
        out_shape=jax.ShapeDtypeStruct((M, N), out_dtype),
        grid_spec=pltpu.PrefetchScalarGridSpec(
            num_scalar_prefetch=0,
            grid=(N // tn, nk),
            in_specs=[
                pl.BlockSpec((M, tk), lambda j, k: (0, k)),
                pl.BlockSpec((tk, tn), lambda j, k: (k, j)),
                pl.BlockSpec((1, tn), lambda j, k: (0, j)),
                pl.BlockSpec((1, tn), lambda j, k: (0, j)),
                pl.BlockSpec((1, tn), lambda j, k: (0, j)),
            ],
            out_specs=pl.BlockSpec((M, tn), lambda j, k: (0, j)),
            scratch_shapes=[pltpu.VMEM((M, tn), jnp.float32)],
        ),
        compiler_params=pltpu.CompilerParams(
            dimension_semantics=("parallel", "arbitrary")),
    )(a, w, b, gamma, beta)


def matmul_bn_lrelu_head(a, w, b, gamma, beta, w4_rows, *, tn, tk,
                         out_dtype=jnp.bfloat16):
    """Layer-3 fused kernel + head partials.
    a: (M, K) bf16, w: (K, N) bf16, b/gamma/beta: (1, N) f32,
    w4_rows: (M, N) bf16 (head conv weight broadcast over batch rows).
    Returns (activations (M, N) bf16, head partials (N//tn, M, 1) f32)."""
    M, K = a.shape
    K2, N = w.shape
    assert K == K2 and w4_rows.shape == (M, N)
    nj = N // tn
    nk = K // tk
    out_shape = (jax.ShapeDtypeStruct((M, N), out_dtype),
                 jax.ShapeDtypeStruct((nj, M, 1), jnp.float32))
    if nk == 1:
        return pl.pallas_call(
            _mm_bn_lrelu_head_1k_kernel,
            out_shape=out_shape,
            grid_spec=pltpu.PrefetchScalarGridSpec(
                num_scalar_prefetch=0,
                grid=(nj,),
                in_specs=[
                    pl.BlockSpec((M, K), lambda j: (0, 0)),
                    pl.BlockSpec((K, tn), lambda j: (0, j)),
                    pl.BlockSpec((1, tn), lambda j: (0, j)),
                    pl.BlockSpec((1, tn), lambda j: (0, j)),
                    pl.BlockSpec((1, tn), lambda j: (0, j)),
                    pl.BlockSpec((M, tn), lambda j: (0, j)),
                ],
                out_specs=[
                    pl.BlockSpec((M, tn), lambda j: (0, j)),
                    pl.BlockSpec((1, M, 1), lambda j: (j, 0, 0)),
                ],
            ),
            compiler_params=pltpu.CompilerParams(
                dimension_semantics=("parallel",)),
        )(a, w, b, gamma, beta, w4_rows)
    return pl.pallas_call(
        _mm_bn_lrelu_head_kernel,
        out_shape=out_shape,
        grid_spec=pltpu.PrefetchScalarGridSpec(
            num_scalar_prefetch=0,
            grid=(nj, nk),
            in_specs=[
                pl.BlockSpec((M, tk), lambda j, k: (0, k)),
                pl.BlockSpec((tk, tn), lambda j, k: (k, j)),
                pl.BlockSpec((1, tn), lambda j, k: (0, j)),
                pl.BlockSpec((1, tn), lambda j, k: (0, j)),
                pl.BlockSpec((1, tn), lambda j, k: (0, j)),
                pl.BlockSpec((M, tn), lambda j, k: (0, j)),
            ],
            out_specs=[
                pl.BlockSpec((M, tn), lambda j, k: (0, j)),
                pl.BlockSpec((1, M, 1), lambda j, k: (j, 0, 0)),
            ],
            scratch_shapes=[pltpu.VMEM((M, tn), jnp.float32)],
        ),
        compiler_params=pltpu.CompilerParams(
            dimension_semantics=("parallel", "arbitrary")),
    )(a, w, b, gamma, beta, w4_rows)


def im2col(x_nhwc, ksize, stride, pad):
    """Pure-indexing patch extraction (XLA glue), all in bf16.  Returns patches
    of shape (N*HO*WO, K*K*C) in (kh, kw, c) order matching HWIO-flattened
    weights, plus (N, HO, WO)."""
    # TODO(synk): fold this gather into the matmul BlockSpec index_map (stride-2
    # row windows per k-step) to remove the XLA patch intermediate / HBM-idle gap.
    N, H, W, C = x_nhwc.shape
    xp = jnp.pad(x_nhwc.astype(jnp.bfloat16),
                 ((0, 0), (pad, pad), (pad, pad), (0, 0)))
    HO = (H + 2 * pad - ksize) // stride + 1
    WO = (W + 2 * pad - ksize) // stride + 1
    cols = []
    for kh in range(ksize):
        for kw in range(ksize):
            cols.append(xp[:, kh:kh + stride * HO:stride,
                           kw:kw + stride * WO:stride, :])
    patches = jnp.stack(cols, axis=3)                       # (N,HO,WO,K*K,C)
    patches = patches.reshape(N * HO * WO, ksize * ksize * C)
    return patches, (N, HO, WO)


# ----------------------------------------------------------------------------
# Full Discriminator forward (Pallas path)
# ----------------------------------------------------------------------------
def discriminator_forward(x_nchw, params):
    x = jnp.transpose(x_nchw, (0, 2, 3, 1)).astype(jnp.bfloat16)   # NCHW->NHWC

    # Layer 1: Conv(ch -> 256, k4 s2 p1) + LeakyReLU(0.2)
    p, (N, HO, WO) = im2col(x, 4, 2, 1)
    M, K = p.shape
    tm = _largest_divisor(M, (256, 128, 64, 32, 16, 8))   # >=2 parallel M tiles
    y = matmul_bias_lrelu(p, params["w1"], params["b1"],
                          tm=tm, tn=256, tk=_choose_tk(K, 256))
    x = y.reshape(N, HO, WO, 256)

    # Layer 2: Conv(256 -> 512, k4 s2 p1) + BatchNorm(512) + LeakyReLU (fused)
    p, (N, HO, WO) = im2col(x, 4, 2, 1)
    _, K = p.shape
    tn = 128                                              # 4 parallel j tiles
    y = matmul_bn_lrelu(p, params["w2"], params["b2"], params["g2"],
                        params["be2"], tn=tn, tk=_choose_tk(K, tn))
    x = y.reshape(N, HO, WO, 512)

    # Layer 3: Conv(512 -> 1024, k4 s2 p1) + BatchNorm(1024) + LeakyReLU,
    # with the output head Conv(1024 -> 1, k4 s1 p0) fused into the epilogue.
    p, (N, HO, WO) = im2col(x, 4, 2, 1)
    assert HO == 4 and WO == 4, "output head expects a 4x4 feature map"
    _, K = p.shape
    tn = 256                                              # 4 parallel j tiles
    w4_rows = jnp.tile(params["w4_sp"], (N, 1))           # (N*16, 1024) bf16
    feats, partials = matmul_bn_lrelu_head(
        p, params["w3"], params["b3"], params["g3"], params["be3"], w4_rows,
        tn=tn, tk=_choose_tk(K, tn))
    del feats   # only needed by feature_extraction(), not forward()

    nj = partials.shape[0]
    logits = partials.reshape(nj, N, HO * WO).sum(axis=(0, 2)) + params["b4"][0, 0]
    y = 1.0 / (1.0 + jnp.exp(-logits))
    return y.reshape(N, 1, 1, 1).astype(jnp.float32)      # matches PyTorch NCHW


# ----------------------------------------------------------------------------
# Pure-JAX reference (mirrors the bf16-input / f32-accumulate arithmetic)
# ----------------------------------------------------------------------------
def _conv_bf16_ref(x, w_hwio, b, stride, pad):
    y = jax.lax.conv_general_dilated(
        x.astype(jnp.bfloat16), w_hwio.astype(jnp.bfloat16),
        window_strides=(stride, stride),
        padding=[(pad, pad), (pad, pad)],
        dimension_numbers=("NHWC", "HWIO", "NHWC"),
        preferred_element_type=jnp.float32)
    return y + b.reshape(1, 1, 1, -1)


def _bn_lrelu_ref(x, gamma, beta):
    mean = jnp.mean(x, axis=(0, 1, 2), keepdims=True)
    var = jnp.mean(jnp.square(x - mean), axis=(0, 1, 2), keepdims=True)
    y = (x - mean) * jax.lax.rsqrt(var + BN_EPS)
    y = y * gamma.reshape(1, 1, 1, -1) + beta.reshape(1, 1, 1, -1)
    return jnp.where(y >= 0, y, LEAKY_SLOPE * y)


def reference_forward(x_nchw, params):
    x = jnp.transpose(x_nchw, (0, 2, 3, 1)).astype(jnp.float32)
    y = _conv_bf16_ref(x, params["w1_4d"], params["b1"][0], 2, 1)
    y = jnp.where(y >= 0, y, LEAKY_SLOPE * y)
    y = _conv_bf16_ref(y, params["w2_4d"], params["b2"][0], 2, 1)
    y = _bn_lrelu_ref(y, params["g2"][0], params["be2"][0])
    y = _conv_bf16_ref(y, params["w3_4d"], params["b3"][0], 2, 1)
    y = _bn_lrelu_ref(y, params["g3"][0], params["be3"][0])
    y = _conv_bf16_ref(y, params["w4_4d"], params["b4"][0], 1, 0)
    y = 1.0 / (1.0 + jnp.exp(-y))
    return jnp.transpose(y, (0, 3, 1, 2))


# ----------------------------------------------------------------------------
# Parameters
# ----------------------------------------------------------------------------
def make_params(key, channels):
    """Deterministic synthetic parameters (shapes from the module __init__).
    Conv weights are stored HWIO f32 (reference) and flattened (KH*KW*Cin, Cout)
    bf16 for the Pallas im2col matmuls."""
    keys = jax.random.split(key, 12)
    params = {}

    def conv(cin, cout, k_idx):
        scale = 1.0 / np.sqrt(cin * 16)
        w = scale * jax.random.normal(keys[k_idx], (4, 4, cin, cout), jnp.float32)
        b = 0.01 * jax.random.normal(keys[k_idx + 1], (1, cout), jnp.float32)
        return w, w.reshape(-1, cout).astype(jnp.bfloat16), b

    params["w1_4d"], params["w1"], params["b1"] = conv(channels, 256, 0)
    params["w2_4d"], params["w2"], params["b2"] = conv(256, 512, 2)
    params["w3_4d"], params["w3"], params["b3"] = conv(512, 1024, 4)
    params["w4_4d"], _, params["b4"] = conv(1024, 1, 6)
    # Head conv weight as (kh*kw, cin) rows matching layer 3's (n,ho,wo) rows.
    params["w4_sp"] = params["w4_4d"].reshape(16, 1024).astype(jnp.bfloat16)
    params["g2"] = 1.0 + 0.1 * jax.random.normal(keys[8], (1, 512), jnp.float32)
    params["be2"] = 0.1 * jax.random.normal(keys[9], (1, 512), jnp.float32)
    params["g3"] = 1.0 + 0.1 * jax.random.normal(keys[10], (1, 1024), jnp.float32)
    params["be3"] = 0.1 * jax.random.normal(keys[11], (1, 1024), jnp.float32)
    return params


# ----------------------------------------------------------------------------
# Main
# ----------------------------------------------------------------------------
if __name__ == "__main__":
    # DCGAN discriminator expects 32x32 spatial input (32 -> 16 -> 8 -> 4 -> 1).
    batch, channels, H, W = 2, 3, 32, 32
    key = jax.random.PRNGKey(0)
    pkey, xkey = jax.random.split(key)
    params = make_params(pkey, channels)
    x = jax.random.normal(xkey, (batch, channels, H, W), jnp.float32)

    out = jax.block_until_ready(discriminator_forward(x, params))
    ref = jax.block_until_ready(reference_forward(x, params))

    assert out.shape == (batch, 1, 1, 1), out.shape
    assert out.dtype == jnp.float32
    if not np.allclose(np.asarray(out), np.asarray(ref), atol=5e-3, rtol=5e-3):
        raise AssertionError(
            f"mismatch vs reference: pallas={np.asarray(out).ravel()} "
            f"ref={np.asarray(ref).ravel()}")
    # TODO(synk): BatchNorm running_mean/running_var momentum updates (training-side
    # buffer mutation) are a stateful side effect not reproduced here.
    print("KERNEL_OK")
</pallas_src>

<mosaic_0001>
module attributes {stable_mosaic.version = 11 : i64} {
  func.func @_mm_bias_lrelu_1k_kernel(%arg0: i32, %arg1: i32, %arg2: memref<256x48xbf16, #tpu.memory_space<vmem>>, %arg3: memref<48x256xbf16, #tpu.memory_space<vmem>>, %arg4: memref<1x256xf32, #tpu.memory_space<vmem>>, %arg5: memref<256x256xbf16, #tpu.memory_space<vmem>>) attributes {dimension_semantics = [#tpu.dimension_semantics<parallel>, #tpu.dimension_semantics<parallel>], iteration_bounds = array<i64: 2, 1>, scalar_prefetch = 0 : i64, scratch_operands = 0 : i64, tpu.core_type = #tpu.core_type<tc>, window_params = [{transform_indices = @transform_0, window_bounds = array<i64: 256, 48>}, {transform_indices = @transform_1, window_bounds = array<i64: 48, 256>}, {transform_indices = @transform_2, window_bounds = array<i64: 1, 256>}, {transform_indices = @transform_3, window_bounds = array<i64: 256, 256>}]} {
    %c0 = arith.constant 0 : index
    %c0_0 = arith.constant 0 : index
    %0 = vector.load %arg2[%c0, %c0_0] : memref<256x48xbf16, #tpu.memory_space<vmem>>, vector<256x48xbf16>
    %c0_1 = arith.constant 0 : index
    %c0_2 = arith.constant 0 : index
    %1 = vector.load %arg3[%c0_1, %c0_2] : memref<48x256xbf16, #tpu.memory_space<vmem>>, vector<48x256xbf16>
    %cst = arith.constant dense<0.000000e+00> : vector<256x256xf32>
    %2 = tpu.matmul %0, %1, %cst {dimension_numbers = #tpu.dot_dimension_numbers<[1], [0], [0], [1], [0, 0, 1, 1], [], []>} : vector<256x48xbf16>, vector<48x256xbf16>, vector<256x256xf32> -> vector<256x256xf32>
    %c0_3 = arith.constant 0 : index
    %c0_4 = arith.constant 0 : index
    %3 = vector.load %arg4[%c0_3, %c0_4] : memref<1x256xf32, #tpu.memory_space<vmem>>, vector<1x256xf32>
    %4 = vector.broadcast %3 : vector<1x256xf32> to vector<256x256xf32>
    %5 = arith.addf %2, %4 : vector<256x256xf32>
    %cst_5 = arith.constant 0.000000e+00 : f32
    %6 = vector.broadcast %cst_5 : f32 to vector<256x256xf32>
    %7 = arith.cmpf oge, %5, %6 : vector<256x256xf32>
    %cst_6 = arith.constant 2.000000e-01 : f32
    %8 = vector.broadcast %cst_6 : f32 to vector<256x256xf32>
    %9 = arith.mulf %8, %5 : vector<256x256xf32>
    %10 = arith.select %7, %5, %9 : vector<256x256xi1>, vector<256x256xf32>
    %11 = arith.truncf %10 : vector<256x256xf32> to vector<256x256xbf16>
    %c0_7 = arith.constant 0 : index
    %c0_8 = arith.constant 0 : index
    %12 = vector.load %arg5[%c0_7, %c0_8] : memref<256x256xbf16, #tpu.memory_space<vmem>>, vector<256x256xbf16>
    tpu.vector_store %arg5[%c0_7, %c0_8], %11 {strides = array<i32>} : memref<256x256xbf16, #tpu.memory_space<vmem>>, vector<256x256xbf16>,
    return
  }
  func.func @transform_0(%arg0: i32, %arg1: i32) -> (i32, i32) {
    %c0_i32 = arith.constant 0 : i32
    %c0_i32_0 = arith.constant 0 : i32
    return %arg0, %c0_i32 : i32, i32
  }
  func.func @transform_1(%arg0: i32, %arg1: i32) -> (i32, i32) {
    %c0_i32 = arith.constant 0 : i32
    %c0_i32_0 = arith.constant 0 : i32
    return %c0_i32, %arg1 : i32, i32
  }
  func.func @transform_2(%arg0: i32, %arg1: i32) -> (i32, i32) {
    %c0_i32 = arith.constant 0 : i32
    %c0_i32_0 = arith.constant 0 : i32
    return %c0_i32, %arg1 : i32, i32
  }
  func.func @transform_3(%arg0: i32, %arg1: i32) -> (i32, i32) {
    %c0_i32 = arith.constant 0 : i32
    return %arg0, %arg1 : i32, i32
  }
}

</mosaic_0001>

<llo_original>
// kernel: tpu_custom_call.1
$region0: #{tpu_custom_call.1}
  #allocation0 [shape = 'u32[]', space=smem, size = 0x4, offset = 0x4, fixed_abs, tag = 'smem constant byte address 0x4 - core index']
  #allocation1 [shape = 'u32[72,128]{1,0:T(1,128)}', space=vmem, size = 0x9000, scoped, tag = 'internal scratch']
  %s0 = inlined_call_operand.vmem [shape: bf16[512,48], index: 0, kind: input, shape index: {}]
  %s1 = inlined_call_operand.vmem [shape: bf16[48,256], index: 1, kind: input, shape index: {}]
  %s2 = inlined_call_operand.vmem [shape: f32[1,256], index: 2, kind: input, shape index: {}]
  %s3 = inlined_call_operand.hbm [shape: bf16[512,256], index: 3, kind: output, shape index: {}]
  %s4 = sld [smem:[#allocation0]]
  $region45: #{tpu_custom_call.1} parent=0
    _
  %s6 = ssub.s32 1, %s4
  %s7 = scalar_select 0, %s6, %s4
  $region1: #{tpu_custom_call.1} parent=0
    #allocation2 [shape = 'u8[262144]{0}', space=vmem, size = 0x40000, scoped, tag = 'output window, operand 0']
    #allocation3 [shape = 's32[2]{0}', space=sflag, size = 0x8, scoped, tag = 'scoped memory for tpu_custom_call.1']
    %8 = vsyncpa [#allocation3], 0
    %s9 = scalar_lea.sflag [#allocation3], 1
    %10 = vsyncpa %s9, 0
    loop: start=0, step=1, limit=4
    $region2: #{tpu_custom_call.1} parent=1 // loop_pre_header
      _
    $region3: #{tpu_custom_call.1} parent=1 // loop_header
      %s12 = sphi 0, %s16
      %p13 = scmp.ge.s32.totalorder %s12, 4
      %s19 = sphi 0, %s31
      %s20 = sphi 0, %s27
      %s21 = sphi 0, %s19
      %s22 = sphi 0, %s20
      %s23 = sphi 0, %s21
      %s24 = sphi 0, %s22
      %s34 = sphi 0, %s36
      %s37 = sphi 0, %s34
      %s38 = sphi 0, %s37
      %s54 = sphi 0, %s38
      %s60 = sphi 0, %s62
      %s63 = sphi 0, %s60
      %s64 = sphi 0, %s63
      %s80 = sphi 0, %s64
      %s86 = sphi 0, %s88
      %s89 = sphi 0, %s86
      %s90 = sphi 0, %s89
      %s106 = sphi 0, %s90
      %s114 = sphi 0, %s116
      %s117 = sphi 0, %s114
      %s118 = sphi 0, %s117
      %s134 = sphi 0, %s118
    $region4: #{tpu_custom_call.1} parent=1 // loop_header_branch
      %15 = sbr.rel (%p13) target = $region8
    $region5: #{tpu_custom_call.1} parent=1 // loop_body
      %s17 = ssub.s32 %s12, 1
      %s18 = ssub.s32 %s12, 2
      %s25 = sadd.s32 1, %s20
      %p26 = scmp.ge.s32.totalorder %s25, 1
      %s27 = scalar_select %p26, 0, %s25
      %s28 = sadd.s32 1, %s19
      %s29 = scalar_select %p26, %s28, %s19
      %p30 = scmp.ge.s32.totalorder %s29, 2
      %s31 = scalar_select %p30, 0, %s29
      %s32 = ssub.s32 %s19, %s31
      %p33 = scmp.eq.s32.totalorder %s32, 0
      %s35 = sadd.s32 %s34, 1
      %s36 = scalar_select %p33, %s34, %s35
      %p39 = pneg %p33
      %p40 = scmp.eq.s32.totalorder %s12, 1
      %p41 = por %p39, %p40
      %p42 = scmp.ne.s32.totalorder %s34, %s37
      %p43 = scmp.eq.s32.totalorder %s12, 0
      %p44 = por %p42, %p43
      %p45 = scmp.ne.s32.totalorder %s34, %s37
      %p46 = scmp.eq.s32.totalorder %s17, 1
      %p47 = por %p45, %p46
      %p48 = scmp.ne.s32.totalorder %s37, %s38
      %p49 = scmp.eq.s32.totalorder %s17, 0
      %p50 = por %p48, %p49
      %p51 = scmp.ne.s32.totalorder %s37, %s38
      %p52 = scmp.eq.s32.totalorder %s18, 1
      %p53 = por %p51, %p52
      %p55 = scmp.ne.s32.totalorder %s38, %s54
      %p56 = scmp.eq.s32.totalorder %s18, 0
      %p57 = por %p55, %p56
      %s58 = ssub.s32 %s20, %s27
      %p59 = scmp.eq.s32.totalorder %s58, 0
      %s61 = sadd.s32 %s60, 1
      %s62 = scalar_select %p59, %s60, %s61
      %p65 = pneg %p59
      %p66 = scmp.eq.s32.totalorder %s12, 1
      %p67 = por %p65, %p66
      %p68 = scmp.ne.s32.totalorder %s60, %s63
      %p69 = scmp.eq.s32.totalorder %s12, 0
      %p70 = por %p68, %p69
      %p71 = scmp.ne.s32.totalorder %s60, %s63
      %p72 = scmp.eq.s32.totalorder %s17, 1
      %p73 = por %p71, %p72
      %p74 = scmp.ne.s32.totalorder %s63, %s64
      %p75 = scmp.eq.s32.totalorder %s17, 0
      %p76 = por %p74, %p75
      %p77 = scmp.ne.s32.totalorder %s63, %s64
      %p78 = scmp.eq.s32.totalorder %s18, 1
      %p79 = por %p77, %p78
      %p81 = scmp.ne.s32.totalorder %s64, %s80
      %p82 = scmp.eq.s32.totalorder %s18, 0
      %p83 = por %p81, %p82
      %s84 = ssub.s32 %s20, %s27
      %p85 = scmp.eq.s32.totalorder %s84, 0
      %s87 = sadd.s32 %s86, 1
      %s88 = scalar_select %p85, %s86, %s87
      %p91 = pneg %p85
      %p92 = scmp.eq.s32.totalorder %s12, 1
      %p93 = por %p91, %p92
      %p94 = scmp.ne.s32.totalorder %s86, %s89
      %p95 = scmp.eq.s32.totalorder %s12, 0
      %p96 = por %p94, %p95
      %p97 = scmp.ne.s32.totalorder %s86, %s89
      %p98 = scmp.eq.s32.totalorder %s17, 1
      %p99 = por %p97, %p98
      %p100 = scmp.ne.s32.totalorder %s89, %s90
      %p101 = scmp.eq.s32.totalorder %s17, 0
      %p102 = por %p100, %p101
      %p103 = scmp.ne.s32.totalorder %s89, %s90
      %p104 = scmp.eq.s32.totalorder %s18, 1
      %p105 = por %p103, %p104
      %p107 = scmp.ne.s32.totalorder %s90, %s106
      %p108 = scmp.eq.s32.totalorder %s18, 0
      %p109 = por %p107, %p108
      %s110 = ssub.s32 %s19, %s31
      %s111 = ssub.s32 %s20, %s27
      %s112 = sor.u32 %s110, %s111
      %p113 = scmp.eq.s32.totalorder %s112, 0
      %s115 = sadd.s32 %s114, 1
      %s116 = scalar_select %p113, %s114, %s115
      %p119 = pneg %p113
      %p120 = scmp.eq.s32.totalorder %s12, 1
      %p121 = por %p119, %p120
      %p122 = scmp.ne.s32.totalorder %s114, %s117
      %p123 = scmp.eq.s32.totalorder %s12, 0
      %p124 = por %p122, %p123
      %p125 = scmp.ne.s32.totalorder %s114, %s117
      %p126 = scmp.eq.s32.totalorder %s17, 1
      %p127 = por %p125, %p126
      %p128 = scmp.ne.s32.totalorder %s117, %s118
      %p129 = scmp.eq.s32.totalorder %s17, 0
      %p130 = por %p128, %p129
      %p131 = scmp.ne.s32.totalorder %s117, %s118
      %p132 = scmp.eq.s32.totalorder %s18, 1
      %p133 = por %p131, %p132
      %p135 = scmp.ne.s32.totalorder %s118, %s134
      %p136 = scmp.eq.s32.totalorder %s18, 0
      %p137 = por %p135, %p136
      %p138 = scmp.le.s32.totalorder 1, %s12
      %p139 = scmp.lt.s32.totalorder %s12, 3
      %p140 = pnand %p138, %p139
      %p141 = pneg %p140
      // Predicated region
      $region9: #{tpu_custom_call.1} parent=5 // pred_check
        _
      $region10: #{tpu_custom_call.1} parent=5 // pred_check_branch
        %143 = sbr.rel (%p140) target = $region12
      $region11: #{tpu_custom_call.1} parent=5 // pred_region
        %s144 = ssub.s32 %s12, 1
        // Predicated region
        $region13: #{tpu_custom_call.1} parent=11 // pred_check
          %p145 = pneg %p76
        $region14: #{tpu_custom_call.1} parent=11 // pred_check_branch
          %147 = sbr.rel (%p145) target = $region16
        $region15: #{tpu_custom_call.1} parent=11 // pred_region
          %s148 = smul.u32 2, %s22
          %p149 = scmp.lt.s32.totalorder %s148, 1
          %s150 = scalar_select %p149, %s148, 1
          %s151 = smul.addr %s150, 4
          %s152 = scalar_lea.vmem %s1, %s151
          %s153 = smul.u32 2, %s22
        $region16: #{tpu_custom_call.1} parent=11 // pred_fallthru
          _
        // Predicated region
        $region17: #{tpu_custom_call.1} parent=11 // pred_check
          %p154 = pneg %p102
        $region18: #{tpu_custom_call.1} parent=11 // pred_check_branch
          %156 = sbr.rel (%p154) target = $region20
        $region19: #{tpu_custom_call.1} parent=11 // pred_region
          %s157 = smul.u32 2, %s22
          %p158 = scmp.lt.s32.totalorder %s157, 1
          %s159 = scalar_select %p158, %s157, 1
          %s160 = scalar_lea.vmem %s2, %s159
          %s161 = smul.u32 2, %s22
        $region20: #{tpu_custom_call.1} parent=11 // pred_fallthru
          _
      $region12: #{tpu_custom_call.1} parent=5 // pred_fallthru
        _
      %p162 = scmp.lt.s32.totalorder %s12, 2
      // Predicated region
      $region21: #{tpu_custom_call.1} parent=5 // pred_check
        %p163 = pneg %p162
      $region22: #{tpu_custom_call.1} parent=5 // pred_check_branch
        %165 = sbr.rel (%p163) target = $region24
      $region23: #{tpu_custom_call.1} parent=5 // pred_region
        // Predicated region
        $region25: #{tpu_custom_call.1} parent=23 // pred_check
          %p166 = pneg %p44
        $region26: #{tpu_custom_call.1} parent=23 // pred_check_branch
          %168 = sbr.rel (%p166) target = $region28
        $region27: #{tpu_custom_call.1} parent=23 // pred_region
          %s169 = smul.u32 32, %s19
          %p170 = scmp.lt.s32.totalorder %s169, 63
          %s171 = scalar_select %p170, %s169, 63
          %s172 = smul.addr %s171, 4
          %s173 = scalar_lea.vmem %s0, %s172
          %s174 = smul.u32 32, %s19
        $region28: #{tpu_custom_call.1} parent=23 // pred_fallthru
          _
      $region24: #{tpu_custom_call.1} parent=5 // pred_fallthru
        _
      %p175 = scmp.le.s32.totalorder 1, %s12
      %p176 = scmp.lt.s32.totalorder %s12, 3
      %p177 = pnand %p175, %p176
      %p178 = pneg %p177
      // Predicated region
      $region29: #{tpu_custom_call.1} parent=5 // pred_check
        _
      $region30: #{tpu_custom_call.1} parent=5 // pred_check_branch
        %180 = sbr.rel (%p177) target = $region32
      $region31: #{tpu_custom_call.1} parent=5 // pred_region
        %s181 = ssub.s32 %s12, 1
        %s182 = smul.u32 32, %s21
        %p183 = scmp.lt.s32.totalorder %s182, 63
        %s184 = scalar_select %p183, %s182, 63
        %s185 = smul.addr %s184, 4
        %s186 = scalar_lea.vmem %s0, %s185
        %p187 = pneg %p50
        %p188 = pneg %p47
        %s189 = smul.u32 2, %s22
        %p190 = scmp.lt.s32.totalorder %s189, 1
        %s191 = scalar_select %p190, %s189, 1
        %s192 = smul.addr %s191, 4
        %s193 = scalar_lea.vmem %s1, %s192
        %p194 = pneg %p76
        %p195 = pneg %p73
        %s196 = smul.u32 2, %s22
        %p197 = scmp.lt.s32.totalorder %s196, 1
        %s198 = scalar_select %p197, %s196, 1
        %s199 = scalar_lea.vmem %s2, %s198
        %p200 = pneg %p102
        %p201 = pneg %p99
        %p202 = pneg %p130
        %p203 = pneg %p127
        %s204 = sand.u32 %s117, 1
        %s205 = scalar_lea.sflag [#allocation3], %s204
        %s206 = sand.u32 %s117, 1
        %s207 = smul.addr %s206, 256
        %s208 = scalar_lea.vmem [#allocation2], %s207
        %s209 = smul.u32 32, %s21
        %p210 = scmp.lt.s32.totalorder %s209, 63
        %s211 = scalar_select %p210, %s209, 63
        %s212 = smul.addr %s211, 4
        %s213 = scalar_lea.vmem %s0, %s212
        %s214 = smul.u32 32, %s21
        %s215 = smul.u32 2, %s22
        %p216 = scmp.lt.s32.totalorder %s215, 1
        %s217 = scalar_select %p216, %s215, 1
        %s218 = smul.addr %s217, 4
        %s219 = scalar_lea.vmem %s1, %s218
        %s220 = smul.u32 2, %s22
        %s221 = smul.u32 2, %s22
        %p222 = scmp.lt.s32.totalorder %s221, 1
        %s223 = scalar_select %p222, %s221, 1
        %s224 = scalar_lea.vmem %s2, %s223
        %s225 = smul.u32 2, %s22
        %s226 = smul.u32 32, %s21
        %s227 = smul.u32 2, %s22
        %v229 = vld [vmem:[%s213] sm:$0xf]
        %v230 = vld [vmem:[%s213 + $0x4] sm:$0xf]
        %v231 = vld [vmem:[%s213 + $0x8] sm:$0xf]
        %v232 = vld [vmem:[%s213 + $0xc] sm:$0xf]
        %v233 = vld [vmem:[%s213 + $0x10] sm:$0xf]
        %v234 = vld [vmem:[%s213 + $0x14] sm:$0xf]
        %v235 = vld [vmem:[%s213 + $0x18] sm:$0xf]
        %v236 = vld [vmem:[%s213 + $0x1c] sm:$0xf]
        %v237 = vld [vmem:[%s213 + $0x20] sm:$0xf]
        %v238 = vld [vmem:[%s213 + $0x24] sm:$0xf]
        %v239 = vld [vmem:[%s213 + $0x28] sm:$0xf]
        %v240 = vld [vmem:[%s213 + $0x2c] sm:$0xf]
        %v241 = vld [vmem:[%s213 + $0x30] sm:$0xf]
        %v242 = vld [vmem:[%s213 + $0x34] sm:$0xf]
        %v243 = vld [vmem:[%s213 + $0x38] sm:$0xf]
        %v244 = vld [vmem:[%s213 + $0x3c] sm:$0xf]
        %v245 = vld [vmem:[%s213 + $0x40] sm:$0xf]
        %v246 = vld [vmem:[%s213 + $0x44] sm:$0xf]
        %v247 = vld [vmem:[%s213 + $0x48] sm:$0xf]
        %v248 = vld [vmem:[%s213 + $0x4c] sm:$0xf]
        %v249 = vld [vmem:[%s213 + $0x50] sm:$0xf]
        %v250 = vld [vmem:[%s213 + $0x54] sm:$0xf]
        %v251 = vld [vmem:[%s213 + $0x58] sm:$0xf]
        %v252 = vld [vmem:[%s213 + $0x5c] sm:$0xf]
        %v253 = vld [vmem:[%s213 + $0x60] sm:$0xf]
        %v254 = vld [vmem:[%s213 + $0x64] sm:$0xf]
        %v255 = vld [vmem:[%s213 + $0x68] sm:$0xf]
        %v256 = vld [vmem:[%s213 + $0x6c] sm:$0xf]
        %v257 = vld [vmem:[%s213 + $0x70] sm:$0xf]
        %v258 = vld [vmem:[%s213 + $0x74] sm:$0xf]
        %v259 = vld [vmem:[%s213 + $0x78] sm:$0xf]
        %v260 = vld [vmem:[%s213 + $0x7c] sm:$0xf]
        %v261 = vld [vmem:[%s219] sm:$0xff]
        %v262 = vld [vmem:[%s219 + $0x8] sm:$0xff]
        %v263 = vld [vmem:[%s219 + $0x10] sm:$0xff]
        %v264 = vld [vmem:[%s219 + $0x18] sm:$0xff]
        %v265 = vld [vmem:[%s219 + $0x20] sm:$0xff]
        %v266 = vld [vmem:[%s219 + $0x28] sm:$0xff]
        %v267 = vld [vmem:[%s224] sm:$0x3]
        %v269 = vperm.slane %v267, 0
        %v270 = vperm.slane %v267, 1
        %v305 = vunpack.c.l.b16 %v229
        %v306 = vunpack.c.l.b16 %v230
        %v307 = vunpack.c.l.b16 %v231
        %v308 = vunpack.c.l.b16 %v232
        %v309 = vunpack.c.l.b16 %v233
        %v310 = vunpack.c.l.b16 %v234
        %v311 = vunpack.c.l.b16 %v235
        %v312 = vunpack.c.l.b16 %v236
        %v313 = vunpack.c.l.b16 %v237
        %v314 = vunpack.c.l.b16 %v238
        %v315 = vunpack.c.l.b16 %v239
        %v316 = vunpack.c.l.b16 %v240
        %v317 = vunpack.c.l.b16 %v241
        %v318 = vunpack.c.l.b16 %v242
        %v319 = vunpack.c.l.b16 %v243
        %v320 = vunpack.c.l.b16 %v244
        %v321 = vunpack.c.l.b16 %v245
        %v322 = vunpack.c.l.b16 %v246
        %v323 = vunpack.c.l.b16 %v247
        %v324 = vunpack.c.l.b16 %v248
        %v325 = vunpack.c.l.b16 %v249
        %v326 = vunpack.c.l.b16 %v250
        %v327 = vunpack.c.l.b16 %v251
        %v328 = vunpack.c.l.b16 %v252
        %v329 = vunpack.c.l.b16 %v253
        %v330 = vunpack.c.l.b16 %v254
        %v331 = vunpack.c.l.b16 %v255
        %v332 = vunpack.c.l.b16 %v256
        %v333 = vunpack.c.l.b16 %v257
        %v334 = vunpack.c.l.b16 %v258
        %v335 = vunpack.c.l.b16 %v259
        %v336 = vunpack.c.l.b16 %v260
        %v337 = vpack.c.b16 %v306, %v305
        %v338 = vpack.c.b16 %v308, %v307
        %v339 = vpack.c.b16 %v310, %v309
        %v340 = vpack.c.b16 %v312, %v311
        %v341 = vpack.c.b16 %v314, %v313
        %v342 = vpack.c.b16 %v316, %v315
        %v343 = vpack.c.b16 %v318, %v317
        %v344 = vpack.c.b16 %v320, %v319
        %v345 = vpack.c.b16 %v322, %v321
        %v346 = vpack.c.b16 %v324, %v323
        %v347 = vpack.c.b16 %v326, %v325
        %v348 = vpack.c.b16 %v328, %v327
        %v349 = vpack.c.b16 %v330, %v329
        %v350 = vpack.c.b16 %v332, %v331
        %v351 = vpack.c.b16 %v334, %v333
        %v352 = vpack.c.b16 %v336, %v335
        %v359 = vunpack.c.l.b16 %v261
        %v360 = vunpack.c.h.b16 %v261
        %v361 = vunpack.c.l.b16 %v262
        %v362 = vunpack.c.h.b16 %v262
        %v363 = vunpack.c.l.b16 %v263
        %v364 = vunpack.c.h.b16 %v263
        %v365 = vunpack.c.l.b16 %v264
        %v366 = vunpack.c.h.b16 %v264
        %v367 = vunpack.c.l.b16 %v265
        %v368 = vunpack.c.h.b16 %v265
        %v369 = vunpack.c.l.b16 %v266
        %v370 = vunpack.c.h.b16 %v266
        %v371 = vpack.c.b16 %v361, %v359
        %v372 = vpack.c.b16 %v362, %v360
        %v373 = vpack.c.b16 %v365, %v363
        %v374 = vpack.c.b16 %v366, %v364
        %v375 = vpack.c.b16 %v369, %v367
        %v376 = vpack.c.b16 %v370, %v368
        %vm383 = vcmask 392192
        %v385 = vsel %vm383, %v337, 0
        %v388 = vsel %vm383, %v338, 0
        %v391 = vsel %vm383, %v339, 0
        %v394 = vsel %vm383, %v340, 0
        %v397 = vsel %vm383, %v341, 0
        %v400 = vsel %vm383, %v342, 0
        %v403 = vsel %vm383, %v343, 0
        %v406 = vsel %vm383, %v344, 0
        %v409 = vsel %vm383, %v345, 0
        %v412 = vsel %vm383, %v346, 0
        %v415 = vsel %vm383, %v347, 0
        %v418 = vsel %vm383, %v348, 0
        %v421 = vsel %vm383, %v349, 0
        %v424 = vsel %vm383, %v350, 0
        %v427 = vsel %vm383, %v351, 0
        %v430 = vsel %vm383, %v352, 0
        %432 = vmatpush.bf16.msra.mxu0 0
        %433 = vmatpush.bf16.msra.mxu0 0
        %434 = vmatpush.bf16.msra.mxu0 0
        %435 = vmatpush.bf16.msra.mxu0 0
        %436 = vmatpush.bf16.msra.mxu0 0
        %437 = vmatpush.bf16.msra.mxu0 %v375
        %438 = vmatpush.bf16.msra.mxu0 %v373
        %439 = vmatpush.bf16.msra.mxu0 %v371
        %440 = vmatmul.bf16.gmra.mxu0 %v385
        %v441 = vpop.f32.mrf.mxu0
        %v442 = vadd.f32 %v269, %v441
        %v443 = vpop.f32.mrf.mxu0
        %v444 = vadd.f32 %v269, %v443
        %445 = vmatmul.bf16.gmra.mxu0 %v388
        %v446 = vpop.f32.mrf.mxu0
        %v447 = vadd.f32 %v269, %v446
        %v448 = vpop.f32.mrf.mxu0
        %v449 = vadd.f32 %v269, %v448
        %450 = vmatmul.bf16.gmra.mxu0 %v391
        %v451 = vpop.f32.mrf.mxu0
        %v452 = vadd.f32 %v269, %v451
        %v453 = vpop.f32.mrf.mxu0
        %v454 = vadd.f32 %v269, %v453
        %455 = vmatmul.bf16.gmra.mxu0 %v394
        %v456 = vpop.f32.mrf.mxu0
        %v457 = vadd.f32 %v269, %v456
        %v458 = vpop.f32.mrf.mxu0
        %v459 = vadd.f32 %v269, %v458
        %460 = vmatmul.bf16.gmra.mxu0 %v397
        %v461 = vpop.f32.mrf.mxu0
        %v462 = vadd.f32 %v269, %v461
        %v463 = vpop.f32.mrf.mxu0
        %v464 = vadd.f32 %v269, %v463
        %465 = vmatmul.bf16.gmra.mxu0 %v400
        %v466 = vpop.f32.mrf.mxu0
        %v467 = vadd.f32 %v269, %v466
        %v468 = vpop.f32.mrf.mxu0
        %v469 = vadd.f32 %v269, %v468
        %470 = vmatmul.bf16.gmra.mxu0 %v403
        %v471 = vpop.f32.mrf.mxu0
        %v472 = vadd.f32 %v269, %v471
        %v473 = vpop.f32.mrf.mxu0
        %v474 = vadd.f32 %v269, %v473
        %475 = vmatmul.bf16.gmra.mxu0 %v406
        %v476 = vpop.f32.mrf.mxu0
        %v477 = vadd.f32 %v269, %v476
        %v478 = vpop.f32.mrf.mxu0
        %v479 = vadd.f32 %v269, %v478
        %480 = vmatmul.bf16.gmra.mxu0 %v409
        %v481 = vpop.f32.mrf.mxu0
        %v482 = vadd.f32 %v269, %v481
        %v483 = vpop.f32.mrf.mxu0
        %v484 = vadd.f32 %v269, %v483
        %485 = vmatmul.bf16.gmra.mxu0 %v412
        %v486 = vpop.f32.mrf.mxu0
        %v487 = vadd.f32 %v269, %v486
        %v488 = vpop.f32.mrf.mxu0
        %v489 = vadd.f32 %v269, %v488
        %490 = vmatmul.bf16.gmra.mxu0 %v415
        %v491 = vpop.f32.mrf.mxu0
        %v492 = vadd.f32 %v269, %v491
        %v493 = vpop.f32.mrf.mxu0
        %v494 = vadd.f32 %v269, %v493
        %495 = vmatmul.bf16.gmra.mxu0 %v418
        %v496 = vpop.f32.mrf.mxu0
        %v497 = vadd.f32 %v269, %v496
        %v498 = vpop.f32.mrf.mxu0
        %v499 = vadd.f32 %v269, %v498
        %500 = vmatmul.bf16.gmra.mxu0 %v421
        %v501 = vpop.f32.mrf.mxu0
        %v502 = vadd.f32 %v269, %v501
        %v503 = vpop.f32.mrf.mxu0
        %v504 = vadd.f32 %v269, %v503
        %505 = vmatmul.bf16.gmra.mxu0 %v424
        %v506 = vpop.f32.mrf.mxu0
        %v507 = vadd.f32 %v269, %v506
        %v508 = vpop.f32.mrf.mxu0
        %v509 = vadd.f32 %v269, %v508
        %510 = vmatmul.bf16.gmra.mxu0 %v427
        %v511 = vpop.f32.mrf.mxu0
        %v512 = vadd.f32 %v269, %v511
        %v513 = vpop.f32.mrf.mxu0
        %v514 = vadd.f32 %v269, %v513
        %515 = vmatmul.bf16.gmra.mxu0 %v430
        %v516 = vpop.f32.mrf.mxu0
        %v517 = vadd.f32 %v269, %v516
        %v518 = vpop.f32.mrf.mxu0
        %v519 = vadd.f32 %v269, %v518
        %520 = vdwg.mxu0
        %521 = vmatpush.bf16.msra.mxu0 0
        %522 = vmatpush.bf16.msra.mxu0 0
        %523 = vmatpush.bf16.msra.mxu0 0
        %524 = vmatpush.bf16.msra.mxu0 0
        %525 = vmatpush.bf16.msra.mxu0 0
        %526 = vmatpush.bf16.msra.mxu0 %v376
        %527 = vmatpush.bf16.msra.mxu0 %v374
        %528 = vmatpush.bf16.msra.mxu0 %v372
        %529 = vmatmul.bf16.gmra.mxu0 %v385
        %v530 = vpop.f32.mrf.mxu0
        %v531 = vadd.f32 %v270, %v530
        %v532 = vpop.f32.mrf.mxu0
        %v533 = vadd.f32 %v270, %v532
        %534 = vmatmul.bf16.gmra.mxu0 %v388
        %v535 = vpop.f32.mrf.mxu0
        %v536 = vadd.f32 %v270, %v535
        %v537 = vpop.f32.mrf.mxu0
        %v538 = vadd.f32 %v270, %v537
        %539 = vmatmul.bf16.gmra.mxu0 %v391
        %v540 = vpop.f32.mrf.mxu0
        %v541 = vadd.f32 %v270, %v540
        %v542 = vpop.f32.mrf.mxu0
        %v543 = vadd.f32 %v270, %v542
        %544 = vmatmul.bf16.gmra.mxu0 %v394
        %v545 = vpop.f32.mrf.mxu0
        %v546 = vadd.f32 %v270, %v545
        %v547 = vpop.f32.mrf.mxu0
        %v548 = vadd.f32 %v270, %v547
        %549 = vmatmul.bf16.gmra.mxu0 %v397
        %v550 = vpop.f32.mrf.mxu0
        %v551 = vadd.f32 %v270, %v550
        %v552 = vpop.f32.mrf.mxu0
        %v553 = vadd.f32 %v270, %v552
        %554 = vmatmul.bf16.gmra.mxu0 %v400
        %v555 = vpop.f32.mrf.mxu0
        %v556 = vadd.f32 %v270, %v555
        %v557 = vpop.f32.mrf.mxu0
        %v558 = vadd.f32 %v270, %v557
        %559 = vmatmul.bf16.gmra.mxu0 %v403
        %v560 = vpop.f32.mrf.mxu0
        %v561 = vadd.f32 %v270, %v560
        %v562 = vpop.f32.mrf.mxu0
        %v563 = vadd.f32 %v270, %v562
        %564 = vmatmul.bf16.gmra.mxu0 %v406
        %v565 = vpop.f32.mrf.mxu0
        %v566 = vadd.f32 %v270, %v565
        %v567 = vpop.f32.mrf.mxu0
        %v568 = vadd.f32 %v270, %v567
        %569 = vmatmul.bf16.gmra.mxu0 %v409
        %v570 = vpop.f32.mrf.mxu0
        %v571 = vadd.f32 %v270, %v570
        %v572 = vpop.f32.mrf.mxu0
        %v573 = vadd.f32 %v270, %v572
        %574 = vmatmul.bf16.gmra.mxu0 %v412
        %v575 = vpop.f32.mrf.mxu0
        %v576 = vadd.f32 %v270, %v575
        %v577 = vpop.f32.mrf.mxu0
        %v578 = vadd.f32 %v270, %v577
        %579 = vmatmul.bf16.gmra.mxu0 %v415
        %v580 = vpop.f32.mrf.mxu0
        %v581 = vadd.f32 %v270, %v580
        %v582 = vpop.f32.mrf.mxu0
        %v583 = vadd.f32 %v270, %v582
        %584 = vmatmul.bf16.gmra.mxu0 %v418
        %v585 = vpop.f32.mrf.mxu0
        %v586 = vadd.f32 %v270, %v585
        %v587 = vpop.f32.mrf.mxu0
        %v588 = vadd.f32 %v270, %v587
        %589 = vmatmul.bf16.gmra.mxu0 %v421
        %v590 = vpop.f32.mrf.mxu0
        %v591 = vadd.f32 %v270, %v590
        %v592 = vpop.f32.mrf.mxu0
        %v593 = vadd.f32 %v270, %v592
        %594 = vmatmul.bf16.gmra.mxu0 %v424
        %v595 = vpop.f32.mrf.mxu0
        %v596 = vadd.f32 %v270, %v595
        %v597 = vpop.f32.mrf.mxu0
        %v598 = vadd.f32 %v270, %v597
        %599 = vmatmul.bf16.gmra.mxu0 %v427
        %v600 = vpop.f32.mrf.mxu0
        %v601 = vadd.f32 %v270, %v600
        %v602 = vpop.f32.mrf.mxu0
        %v603 = vadd.f32 %v270, %v602
        %604 = vmatmul.bf16.gmra.mxu0 %v430
        %v605 = vpop.f32.mrf.mxu0
        %v606 = vadd.f32 %v270, %v605
        %v607 = vpop.f32.mrf.mxu0
        %v608 = vadd.f32 %v270, %v607
        %609 = vdwg.mxu0
        %vm610 = vcmp.ge.f32.partialorder %v442, 0.0
        %vm611 = vcmp.ge.f32.partialorder %v531, 0.0
        %vm612 = vcmp.ge.f32.partialorder %v444, 0.0
        %vm613 = vcmp.ge.f32.partialorder %v533, 0.0
        %vm614 = vcmp.ge.f32.partialorder %v447, 0.0
        %vm615 = vcmp.ge.f32.partialorder %v536, 0.0
        %vm616 = vcmp.ge.f32.partialorder %v449, 0.0
        %vm617 = vcmp.ge.f32.partialorder %v538, 0.0
        %vm618 = vcmp.ge.f32.partialorder %v452, 0.0
        %vm619 = vcmp.ge.f32.partialorder %v541, 0.0
        %vm620 = vcmp.ge.f32.partialorder %v454, 0.0
        %vm621 = vcmp.ge.f32.partialorder %v543, 0.0
        %vm622 = vcmp.ge.f32.partialorder %v457, 0.0
        %vm623 = vcmp.ge.f32.partialorder %v546, 0.0
        %vm624 = vcmp.ge.f32.partialorder %v459, 0.0
        %vm625 = vcmp.ge.f32.partialorder %v548, 0.0
        %vm626 = vcmp.ge.f32.partialorder %v462, 0.0
        %vm627 = vcmp.ge.f32.partialorder %v551, 0.0
        %vm628 = vcmp.ge.f32.partialorder %v464, 0.0
        %vm629 = vcmp.ge.f32.partialorder %v553, 0.0
        %vm630 = vcmp.ge.f32.partialorder %v467, 0.0
        %vm631 = vcmp.ge.f32.partialorder %v556, 0.0
        %vm632 = vcmp.ge.f32.partialorder %v469, 0.0
        %vm633 = vcmp.ge.f32.partialorder %v558, 0.0
        %vm634 = vcmp.ge.f32.partialorder %v472, 0.0
        %vm635 = vcmp.ge.f32.partialorder %v561, 0.0
        %vm636 = vcmp.ge.f32.partialorder %v474, 0.0
        %vm637 = vcmp.ge.f32.partialorder %v563, 0.0
        %vm638 = vcmp.ge.f32.partialorder %v477, 0.0
        %vm639 = vcmp.ge.f32.partialorder %v566, 0.0
        %vm640 = vcmp.ge.f32.partialorder %v479, 0.0
        %vm641 = vcmp.ge.f32.partialorder %v568, 0.0
        %vm642 = vcmp.ge.f32.partialorder %v482, 0.0
        %vm643 = vcmp.ge.f32.partialorder %v571, 0.0
        %vm644 = vcmp.ge.f32.partialorder %v484, 0.0
        %vm645 = vcmp.ge.f32.partialorder %v573, 0.0
        %vm646 = vcmp.ge.f32.partialorder %v487, 0.0
        %vm647 = vcmp.ge.f32.partialorder %v576, 0.0
        %vm648 = vcmp.ge.f32.partialorder %v489, 0.0
        %vm649 = vcmp.ge.f32.partialorder %v578, 0.0
        %vm650 = vcmp.ge.f32.partialorder %v492, 0.0
        %vm651 = vcmp.ge.f32.partialorder %v581, 0.0
        %vm652 = vcmp.ge.f32.partialorder %v494, 0.0
        %vm653 = vcmp.ge.f32.partialorder %v583, 0.0
        %vm654 = vcmp.ge.f32.partialorder %v497, 0.0
        %vm655 = vcmp.ge.f32.partialorder %v586, 0.0
        %vm656 = vcmp.ge.f32.partialorder %v499, 0.0
        %vm657 = vcmp.ge.f32.partialorder %v588, 0.0
        %vm658 = vcmp.ge.f32.partialorder %v502, 0.0
        %vm659 = vcmp.ge.f32.partialorder %v591, 0.0
        %vm660 = vcmp.ge.f32.partialorder %v504, 0.0
        %vm661 = vcmp.ge.f32.partialorder %v593, 0.0
        %vm662 = vcmp.ge.f32.partialorder %v507, 0.0
        %vm663 = vcmp.ge.f32.partialorder %v596, 0.0
        %vm664 = vcmp.ge.f32.partialorder %v509, 0.0
        %vm665 = vcmp.ge.f32.partialorder %v598, 0.0
        %vm666 = vcmp.ge.f32.partialorder %v512, 0.0
        %vm667 = vcmp.ge.f32.partialorder %v601, 0.0
        %vm668 = vcmp.ge.f32.partialorder %v514, 0.0
        %vm669 = vcmp.ge.f32.partialorder %v603, 0.0
        %vm670 = vcmp.ge.f32.partialorder %v517, 0.0
        %vm671 = vcmp.ge.f32.partialorder %v606, 0.0
        %vm672 = vcmp.ge.f32.partialorder %v519, 0.0
        %vm673 = vcmp.ge.f32.partialorder %v608, 0.0
        %v674 = vmul.f32 %v442, 0.2
        %v675 = vmul.f32 %v531, 0.2
        %v676 = vmul.f32 %v444, 0.2
        %v677 = vmul.f32 %v533, 0.2
        %v678 = vmul.f32 %v447, 0.2
        %v679 = vmul.f32 %v536, 0.2
        %v680 = vmul.f32 %v449, 0.2
        %v681 = vmul.f32 %v538, 0.2
        %v682 = vmul.f32 %v452, 0.2
        %v683 = vmul.f32 %v541, 0.2
        %v684 = vmul.f32 %v454, 0.2
        %v685 = vmul.f32 %v543, 0.2
        %v686 = vmul.f32 %v457, 0.2
        %v687 = vmul.f32 %v546, 0.2
        %v688 = vmul.f32 %v459, 0.2
        %v689 = vmul.f32 %v548, 0.2
        %v690 = vmul.f32 %v462, 0.2
        %v691 = vmul.f32 %v551, 0.2
        %v692 = vmul.f32 %v464, 0.2
        %v693 = vmul.f32 %v553, 0.2
        %v694 = vmul.f32 %v467, 0.2
        %v695 = vmul.f32 %v556, 0.2
        %v696 = vmul.f32 %v469, 0.2
        %v697 = vmul.f32 %v558, 0.2
        %v698 = vmul.f32 %v472, 0.2
        %v699 = vmul.f32 %v561, 0.2
        %v700 = vmul.f32 %v474, 0.2
        %v701 = vmul.f32 %v563, 0.2
        %v702 = vmul.f32 %v477, 0.2
        %v703 = vmul.f32 %v566, 0.2
        %v704 = vmul.f32 %v479, 0.2
        %v705 = vmul.f32 %v568, 0.2
        %v706 = vmul.f32 %v482, 0.2
        %v707 = vmul.f32 %v571, 0.2
        %v708 = vmul.f32 %v484, 0.2
        %v709 = vmul.f32 %v573, 0.2
        %v710 = vmul.f32 %v487, 0.2
        %v711 = vmul.f32 %v576, 0.2
        %v712 = vmul.f32 %v489, 0.2
        %v713 = vmul.f32 %v578, 0.2
        %v714 = vmul.f32 %v492, 0.2
        %v715 = vmul.f32 %v581, 0.2
        %v716 = vmul.f32 %v494, 0.2
        %v717 = vmul.f32 %v583, 0.2
        %v718 = vmul.f32 %v497, 0.2
        %v719 = vmul.f32 %v586, 0.2
        %v720 = vmul.f32 %v499, 0.2
        %v721 = vmul.f32 %v588, 0.2
        %v722 = vmul.f32 %v502, 0.2
        %v723 = vmul.f32 %v591, 0.2
        %v724 = vmul.f32 %v504, 0.2
        %v725 = vmul.f32 %v593, 0.2
        %v726 = vmul.f32 %v507, 0.2
        %v727 = vmul.f32 %v596, 0.2
        %v728 = vmul.f32 %v509, 0.2
        %v729 = vmul.f32 %v598, 0.2
        %v730 = vmul.f32 %v512, 0.2
        %v731 = vmul.f32 %v601, 0.2
        %v732 = vmul.f32 %v514, 0.2
        %v733 = vmul.f32 %v603, 0.2
        %v734 = vmul.f32 %v517, 0.2
        %v735 = vmul.f32 %v606, 0.2
        %v736 = vmul.f32 %v519, 0.2
        %v737 = vmul.f32 %v608, 0.2
        %v738 = vsel %vm610, %v442, %v674
        %v739 = vsel %vm611, %v531, %v675
        %v740 = vsel %vm612, %v444, %v676
        %v741 = vsel %vm613, %v533, %v677
        %v742 = vsel %vm614, %v447, %v678
        %v743 = vsel %vm615, %v536, %v679
        %v744 = vsel %vm616, %v449, %v680
        %v745 = vsel %vm617, %v538, %v681
        %v746 = vsel %vm618, %v452, %v682
        %v747 = vsel %vm619, %v541, %v683
        %v748 = vsel %vm620, %v454, %v684
        %v749 = vsel %vm621, %v543, %v685
        %v750 = vsel %vm622, %v457, %v686
        %v751 = vsel %vm623, %v546, %v687
        %v752 = vsel %vm624, %v459, %v688
        %v753 = vsel %vm625, %v548, %v689
        %v754 = vsel %vm626, %v462, %v690
        %v755 = vsel %vm627, %v551, %v691
        %v756 = vsel %vm628, %v464, %v692
        %v757 = vsel %vm629, %v553, %v693
        %v758 = vsel %vm630, %v467, %v694
        %v759 = vsel %vm631, %v556, %v695
        %v760 = vsel %vm632, %v469, %v696
        %v761 = vsel %vm633, %v558, %v697
        %v762 = vsel %vm634, %v472, %v698
        %v763 = vsel %vm635, %v561, %v699
        %v764 = vsel %vm636, %v474, %v700
        %v765 = vsel %vm637, %v563, %v701
        %v766 = vsel %vm638, %v477, %v702
        %v767 = vsel %vm639, %v566, %v703
        %v768 = vsel %vm640, %v479, %v704
        %v769 = vsel %vm641, %v568, %v705
        %v770 = vsel %vm642, %v482, %v706
        %v771 = vsel %vm643, %v571, %v707
        %v772 = vsel %vm644, %v484, %v708
        %v773 = vsel %vm645, %v573, %v709
        %v774 = vsel %vm646, %v487, %v710
        %v775 = vsel %vm647, %v576, %v711
        %v776 = vsel %vm648, %v489, %v712
        %v777 = vsel %vm649, %v578, %v713
        %v778 = vsel %vm650, %v492, %v714
        %v779 = vsel %vm651, %v581, %v715
        %v780 = vsel %vm652, %v494, %v716
        %v781 = vsel %vm653, %v583, %v717
        %v782 = vsel %vm654, %v497, %v718
        %v783 = vsel %vm655, %v586, %v719
        %v784 = vsel %vm656, %v499, %v720
        %v785 = vsel %vm657, %v588, %v721
        %v786 = vsel %vm658, %v502, %v722
        %v787 = vsel %vm659, %v591, %v723
        %v788 = vsel %vm660, %v504, %v724
        %v789 = vsel %vm661, %v593, %v725
        %v790 = vsel %vm662, %v507, %v726
        %v791 = vsel %vm663, %v596, %v727
        %v792 = vsel %vm664, %v509, %v728
        %v793 = vsel %vm665, %v598, %v729
        %v794 = vsel %vm666, %v512, %v730
        %v795 = vsel %vm667, %v601, %v731
        %v796 = vsel %vm668, %v514, %v732
        %v797 = vsel %vm669, %v603, %v733
        %v798 = vsel %vm670, %v517, %v734
        %v799 = vsel %vm671, %v606, %v735
        %v800 = vsel %vm672, %v519, %v736
        %v801 = vsel %vm673, %v608, %v737
        %v802 = vpack.c.bf16 %v739, %v738
        %v803 = vpack.c.bf16 %v741, %v740
        %v804 = vpack.c.bf16 %v743, %v742
        %v805 = vpack.c.bf16 %v745, %v744
        %v806 = vpack.c.bf16 %v747, %v746
        %v807 = vpack.c.bf16 %v749, %v748
        %v808 = vpack.c.bf16 %v751, %v750
        %v809 = vpack.c.bf16 %v753, %v752
        %v810 = vpack.c.bf16 %v755, %v754
        %v811 = vpack.c.bf16 %v757, %v756
        %v812 = vpack.c.bf16 %v759, %v758
        %v813 = vpack.c.bf16 %v761, %v760
        %v814 = vpack.c.bf16 %v763, %v762
        %v815 = vpack.c.bf16 %v765, %v764
        %v816 = vpack.c.bf16 %v767, %v766
        %v817 = vpack.c.bf16 %v769, %v768
        %v818 = vpack.c.bf16 %v771, %v770
        %v819 = vpack.c.bf16 %v773, %v772
        %v820 = vpack.c.bf16 %v775, %v774
        %v821 = vpack.c.bf16 %v777, %v776
        %v822 = vpack.c.bf16 %v779, %v778
        %v823 = vpack.c.bf16 %v781, %v780
        %v824 = vpack.c.bf16 %v783, %v782
        %v825 = vpack.c.bf16 %v785, %v784
        %v826 = vpack.c.bf16 %v787, %v786
        %v827 = vpack.c.bf16 %v789, %v788
        %v828 = vpack.c.bf16 %v791, %v790
        %v829 = vpack.c.bf16 %v793, %v792
        %v830 = vpack.c.bf16 %v795, %v794
        %v831 = vpack.c.bf16 %v797, %v796
        %v832 = vpack.c.bf16 %v799, %v798
        %v833 = vpack.c.bf16 %v801, %v800
        %834 = vst [vmem:[%s208] sm:$0xff] %v802
        %835 = vst [vmem:[%s208 + $0x8] sm:$0xff] %v803
        %836 = vst [vmem:[%s208 + $0x10] sm:$0xff] %v804
        %837 = vst [vmem:[%s208 + $0x18] sm:$0xff] %v805
        %838 = vst [vmem:[%s208 + $0x20] sm:$0xff] %v806
        %839 = vst [vmem:[%s208 + $0x28] sm:$0xff] %v807
        %840 = vst [vmem:[%s208 + $0x30] sm:$0xff] %v808
        %841 = vst [vmem:[%s208 + $0x38] sm:$0xff] %v809
        %842 = vst [vmem:[%s208 + $0x40] sm:$0xff] %v810
        %843 = vst [vmem:[%s208 + $0x48] sm:$0xff] %v811
        %844 = vst [vmem:[%s208 + $0x50] sm:$0xff] %v812
        %845 = vst [vmem:[%s208 + $0x58] sm:$0xff] %v813
        %846 = vst [vmem:[%s208 + $0x60] sm:$0xff] %v814
        %847 = vst [vmem:[%s208 + $0x68] sm:$0xff] %v815
        %848 = vst [vmem:[%s208 + $0x70] sm:$0xff] %v816
        %849 = vst [vmem:[%s208 + $0x78] sm:$0xff] %v817
        %850 = vst [vmem:[%s208 + $0x80] sm:$0xff] %v818
        %851 = vst [vmem:[%s208 + $0x88] sm:$0xff] %v819
        %852 = vst [vmem:[%s208 + $0x90] sm:$0xff] %v820
        %853 = vst [vmem:[%s208 + $0x98] sm:$0xff] %v821
        %854 = vst [vmem:[%s208 + $0xa0] sm:$0xff] %v822
        %855 = vst [vmem:[%s208 + $0xa8] sm:$0xff] %v823
        %856 = vst [vmem:[%s208 + $0xb0] sm:$0xff] %v824
        %857 = vst [vmem:[%s208 + $0xb8] sm:$0xff] %v825
        %858 = vst [vmem:[%s208 + $0xc0] sm:$0xff] %v826
        %859 = vst [vmem:[%s208 + $0xc8] sm:$0xff] %v827
        %860 = vst [vmem:[%s208 + $0xd0] sm:$0xff] %v828
        %861 = vst [vmem:[%s208 + $0xd8] sm:$0xff] %v829
        %862 = vst [vmem:[%s208 + $0xe0] sm:$0xff] %v830
        %863 = vst [vmem:[%s208 + $0xe8] sm:$0xff] %v831
        %864 = vst [vmem:[%s208 + $0xf0] sm:$0xff] %v832
        %865 = vst [vmem:[%s208 + $0xf8] sm:$0xff] %v833
        %s866 = sand.u32 %s117, 1
        %s867 = scalar_lea.sflag [#allocation3], %s866
        %s868 = sand.u32 %s117, 1
        %s869 = smul.addr %s868, 256
        %s870 = scalar_lea.vmem [#allocation2], %s869
        // Predicated region
        $region33: #{tpu_custom_call.1} parent=31 // pred_check
          %p871 = pneg %p127
        $region34: #{tpu_custom_call.1} parent=31 // pred_check_branch
          %873 = sbr.rel (%p871) target = $region36
        $region35: #{tpu_custom_call.1} parent=31 // pred_region
          %s874 = smul.u32 32, %s21
          %s875 = smul.u32 2, %s22
          %877 = vsyncadd %s867, 0
          %s878 = smul.addr %s874, 2
          %s879 = sadd.s32 %s875, %s878
          %s880 = smul.addr %s879, 4
          %s881 = scalar_lea.hbm %s3, %s880
          %s882 = sshll.u32 %s870, 4
          %s883 = int_to_ptr.vmem [resolvable:$true] %s882
          %s884 = sshll.u32 %s881, 4
          %s885 = int_to_ptr.hbm [resolvable:$true] %s884
          %890 = dma.vmem_to_hbm [thread:$0]  %s883, 4096, %s885, %s867, 128, 128, 8
        $region36: #{tpu_custom_call.1} parent=31 // pred_fallthru
          _
      $region32: #{tpu_custom_call.1} parent=5 // pred_fallthru
        _
      %p891 = scmp.le.s32.totalorder 2, %s12
      // Predicated region
      $region37: #{tpu_custom_call.1} parent=5 // pred_check
        %p892 = pneg %p891
      $region38: #{tpu_custom_call.1} parent=5 // pred_check_branch
        %894 = sbr.rel (%p892) target = $region40
      $region39: #{tpu_custom_call.1} parent=5 // pred_region
        %s895 = ssub.s32 %s12, 2
        // Predicated region
        $region41: #{tpu_custom_call.1} parent=39 // pred_check
          %p896 = pneg %p133
        $region42: #{tpu_custom_call.1} parent=39 // pred_check_branch
          %898 = sbr.rel (%p896) target = $region44
        $region43: #{tpu_custom_call.1} parent=39 // pred_region
          %s899 = sand.u32 %s118, 1
          %s900 = scalar_lea.sflag [#allocation3], %s899
          %s901 = sand.u32 %s118, 1
          %s902 = smul.addr %s901, 256
          %s903 = scalar_lea.vmem [#allocation2], %s902
          %905 = dma.done %s900, 4096
        $region44: #{tpu_custom_call.1} parent=39 // pred_fallthru
          _
      $region40: #{tpu_custom_call.1} parent=5 // pred_fallthru
        _
    $region6: #{tpu_custom_call.1} parent=1 // loop_footer
      %s16 = sadd.s32 1, %s12
    $region7: #{tpu_custom_call.1} parent=1 // loop_footer_branch
      %11 = sbr.rel target = $region3
    $region8: #{tpu_custom_call.1} parent=1 // loop_exit
      _
    %906 = vsyncpa [#allocation3], 1
    %s907 = scalar_lea.sflag [#allocation3], 1
    %908 = vsyncpa %s907, 1

</llo_original>
